<compile_context>
chip_gen: v6e
topology: v6e:2x2x1
jax: 0.10.0
libtpu: 0.0.40
codegen_flags: <defaults>
</compile_context>

<pallas_src>
import itertools

import numpy as np
import jax
import jax.numpy as jnp
from jax.experimental import pallas as pl
from jax.experimental.pallas import tpu as pltpu


def _round_up(n, m):
    return ((n + m - 1) // m) * m


def _select_relations(num_frames, subsample_num, sample_seed):
    """Scales + selected relation tuples per scale (shared by kernel & reference)."""
    scales = list(range(num_frames, 1, -1))
    relations_scales = [list(itertools.combinations(range(num_frames), s))
                        for s in scales]
    subsample_scales = [min(subsample_num, len(r)) for r in relations_scales]
    rng = np.random.RandomState(sample_seed)
    selected_per_scale = []
    for si in range(len(scales)):
        if si == 0:
            selected = [relations_scales[0][0]]   # the single full-ordered relation
        else:
            idxs = rng.choice(len(relations_scales[si]), subsample_scales[si],
                              replace=False)
            selected = [relations_scales[si][int(i)] for i in idxs]
        selected_per_scale.append(selected)
    return scales, selected_per_scale


def _fused_trn_mlp(scale_ids, frame_idx, nframes, x_t, w1_all, b1_all, w2_all,
                   b2_sum, *, block_b, num_b_blocks):
    """One pallas_call over all (scale, relation) pairs.

    scale_ids : [G] int32     (scalar prefetch) scale index per relation
    frame_idx : [G, T] int32  (scalar prefetch) frame indices per relation
    nframes   : [G] int32     (scalar prefetch) number of valid frames per relation
    x_t       : [T, B_pad, D_pad]      relu'd input, frame axis leading (bf16)
    w1_all    : [S, T*D_pad, H_pad]    per-scale W1 packed as T zero-padded D chunks
    b1_all    : [S, 1, H_pad]  f32
    w2_all    : [S, H_pad, C_pad]
    b2_sum    : [1, C_pad]     f32  hoisted sum_s R_s * b2_s
    returns   : [B_pad, C_pad] f32
    """
    G = scale_ids.shape[0]
    T, B_pad, D_pad = x_t.shape
    H_pad = w1_all.shape[2]
    C_pad = w2_all.shape[2]
    compute_dtype = x_t.dtype

    def kernel(scale_ref, frame_ref, nfr_ref, x_ref, w1_ref, b1_ref, w2_ref,
               b2_ref, o_ref, h_ref):
        del scale_ref  # only used by the index_maps
        g = pl.program_id(1)

        # Hoisted b2: initialize the resident output block with sum_s R_s * b2_s.
        @pl.when(g == 0)
        def _():
            o_ref[...] = jnp.broadcast_to(b2_ref[...], o_ref.shape)

        # ---- layer 1, per-frame decomposition --------------------------------
        # h = b1 + sum_j relu(x)[frame_j] @ W1_chunk_j  (frame slot 0 always valid)
        f0 = frame_ref[g, 0]
        h_ref[...] = b1_ref[...] + jnp.dot(
            x_ref[f0], w1_ref[pl.ds(0, D_pad), :],
            preferred_element_type=jnp.float32)
        for j in range(1, T):
            @pl.when(j < nfr_ref[g])       # skip MXU work for unused frame slots
            def _(j=j):
                fj = frame_ref[g, j]
                h_ref[...] += jnp.dot(
                    x_ref[fj], w1_ref[pl.ds(j * D_pad, D_pad), :],
                    preferred_element_type=jnp.float32)

        # ---- layer 2 + accumulate over relations ------------------------------
        h = jnp.maximum(h_ref[...], 0.0).astype(compute_dtype)
        o_ref[...] += jnp.dot(h, w2_ref[...], preferred_element_type=jnp.float32)

    return pl.pallas_call(
        kernel,
        out_shape=jax.ShapeDtypeStruct((B_pad, C_pad), jnp.float32),
        grid_spec=pltpu.PrefetchScalarGridSpec(
            num_scalar_prefetch=3,
            grid=(num_b_blocks, G),
            in_specs=[
                # relu(x): block index constant across relations -> DMA'd once
                # per batch block, VMEM-resident for the whole relation loop.
                pl.BlockSpec((T, block_b, D_pad),
                             lambda b, g, sc, fr, nf: (0, b, 0)),
                # Per-scale W1 / b1 / W2: block index repeats while the scale is
                # unchanged (relations are scale-ordered) -> streamed once/scale.
                pl.BlockSpec((None, T * D_pad, H_pad),
                             lambda b, g, sc, fr, nf: (sc[g], 0, 0)),
                pl.BlockSpec((None, 1, H_pad),
                             lambda b, g, sc, fr, nf: (sc[g], 0, 0)),
                pl.BlockSpec((None, H_pad, C_pad),
                             lambda b, g, sc, fr, nf: (sc[g], 0, 0)),
                pl.BlockSpec((1, C_pad),
                             lambda b, g, sc, fr, nf: (0, 0)),
            ],
            out_specs=pl.BlockSpec((block_b, C_pad),
                                   lambda b, g, sc, fr, nf: (b, 0)),
            scratch_shapes=[pltpu.VMEM((block_b, H_pad), jnp.float32)],
        ),
        # Batch axis: distinct output rows per block -> safe to run in parallel
        # (uses both v7x TensorCores). Relation axis accumulates into the same
        # output block -> must stay "arbitrary".
        compiler_params=pltpu.CompilerParams(
            dimension_semantics=("parallel", "arbitrary"),
            vmem_limit_bytes=64 * 1024 * 1024,
        ),
    )(scale_ids, frame_idx, nframes, x_t, w1_all, b1_all, w2_all, b2_sum)


def init_relation_module_params(key, img_feature_dim, num_frames, num_class,
                                num_bottleneck=256):
    """One (W1, b1, W2, b2) per scale, PyTorch-Linear-style uniform init."""
    scales = list(range(num_frames, 1, -1))
    params = []
    for scale in scales:
        k_in = scale * img_feature_dim
        key, k1, k2, k3, k4 = jax.random.split(key, 5)
        lim1 = 1.0 / np.sqrt(k_in)
        lim2 = 1.0 / np.sqrt(num_bottleneck)
        w1 = jax.random.uniform(k1, (k_in, num_bottleneck), jnp.float32, -lim1, lim1)
        b1 = jax.random.uniform(k2, (1, num_bottleneck), jnp.float32, -lim1, lim1)
        w2 = jax.random.uniform(k3, (num_bottleneck, num_class), jnp.float32, -lim2, lim2)
        b2 = jax.random.uniform(k4, (1, num_class), jnp.float32, -lim2, lim2)
        params.append((w1, b1, w2, b2))
    return params


def relation_module_multiscale_forward(x, params, img_feature_dim, num_frames,
                                       num_class, subsample_num=3, sample_seed=0,
                                       mxu_dtype=jnp.bfloat16):
    """Forward pass of RelationModuleMultiScale. x: [B, T, D]."""
    B, T, D = x.shape
    assert T == num_frames and D == img_feature_dim
    num_bottleneck = params[0][0].shape[1]

    scales, selected_per_scale = _select_relations(num_frames, subsample_num,
                                                   sample_seed)
    S = len(scales)

    # Padded / blocked sizes.
    D_pad = _round_up(D, 128)
    H_pad = _round_up(num_bottleneck, 128)
    C_pad = _round_up(num_class, 128)
    B_pad = _round_up(B, 8)
    if B_pad > 128:                       # block batch so v7x can split across TCs
        B_pad = _round_up(B_pad, 128)
        block_b = 128
    else:
        block_b = B_pad
    num_b_blocks = B_pad // block_b

    # Flattened (scale, relation) work list; relations stay grouped by scale so
    # the per-scale weight blocks are only DMA'd when the scale changes.
    work = [(si, rel) for si, sel in enumerate(selected_per_scale) for rel in sel]
    G = len(work)
    scale_ids = jnp.asarray([si for si, _ in work], dtype=jnp.int32)
    nframes = jnp.asarray([len(rel) for _, rel in work], dtype=jnp.int32)
    frame_np = np.zeros((G, T), np.int32)
    for gi, (_, rel) in enumerate(work):
        frame_np[gi, :len(rel)] = rel     # unused slots gated by nframes anyway
    frame_idx = jnp.asarray(frame_np)

    # Hoisted ReLU (elementwise, commutes with the frame gather / flatten);
    # frame axis leading so the in-kernel gather is a first-axis dynamic index.
    x_relu = jnp.maximum(x, 0.0)
    x_p = jnp.pad(x_relu, ((0, B_pad - B), (0, 0), (0, D_pad - D)))
    x_t = jnp.transpose(x_p, (1, 0, 2)).astype(mxu_dtype)     # [T, B_pad, D_pad]

    # Per-scale weights: W1 packed as T zero-padded [D_pad, H_pad] frame chunks.
    w1_l, b1_l, w2_l = [], [], []
    b2_sum = jnp.zeros((1, C_pad), jnp.float32)
    for si, scale in enumerate(scales):
        w1, b1, w2, b2 = params[si]
        chunks = []
        for j in range(scale):
            chunk = w1[j * D:(j + 1) * D, :]
            chunks.append(jnp.pad(chunk, ((0, D_pad - D), (0, H_pad - num_bottleneck))))
        for _ in range(T - scale):
            chunks.append(jnp.zeros((D_pad, H_pad), w1.dtype))
        w1_l.append(jnp.concatenate(chunks, axis=0))           # [T*D_pad, H_pad]
        b1_l.append(jnp.pad(b1, ((0, 0), (0, H_pad - num_bottleneck))))
        w2_l.append(jnp.pad(w2, ((0, H_pad - num_bottleneck), (0, C_pad - num_class))))
        # b2 is added once per selected relation -> hoist R_s * b2.
        b2_sum = b2_sum + len(selected_per_scale[si]) * jnp.pad(
            b2, ((0, 0), (0, C_pad - num_class)))
    w1_all = jnp.stack(w1_l, axis=0).astype(mxu_dtype)         # [S, T*D_pad, H_pad]
    b1_all = jnp.stack(b1_l, axis=0)                           # [S, 1, H_pad] f32
    w2_all = jnp.stack(w2_l, axis=0).astype(mxu_dtype)         # [S, H_pad, C_pad]

    out_pad = _fused_trn_mlp(scale_ids, frame_idx, nframes, x_t, w1_all, b1_all,
                             w2_all, b2_sum, block_b=block_b,
                             num_b_blocks=num_b_blocks)        # [B_pad, C_pad]
    return out_pad[:B, :num_class]


def _reference_forward(x, params, img_feature_dim, num_frames, num_class,
                       subsample_num=3, sample_seed=0):
    """Pure-JAX f32 reference (same relation sampling) for correctness checking."""
    B = x.shape[0]
    scales, selected_per_scale = _select_relations(num_frames, subsample_num,
                                                   sample_seed)
    out = None
    for si, scale in enumerate(scales):
        w1, b1, w2, b2 = params[si]
        for rel in selected_per_scale[si]:
            a = x[:, list(rel), :].reshape(B, scale * img_feature_dim)
            a = jnp.maximum(a, 0.0)
            h = jnp.maximum(a @ w1 + b1, 0.0)
            y = h @ w2 + b2
            out = y if out is None else out + y
    return out


if __name__ == "__main__":
    # Small shapes consistent with the module: input [B, num_frames, img_feature_dim]
    B, num_frames, img_feature_dim, num_class = 2, 4, 16, 8

    key = jax.random.PRNGKey(0)
    k_x, k_p = jax.random.split(key)
    x = jax.random.normal(k_x, (B, num_frames, img_feature_dim), dtype=jnp.float32)
    params = init_relation_module_params(k_p, img_feature_dim, num_frames, num_class)

    out = relation_module_multiscale_forward(
        x, params, img_feature_dim, num_frames, num_class, sample_seed=0)
    out = jax.block_until_ready(out)

    ref = _reference_forward(
        x, params, img_feature_dim, num_frames, num_class, sample_seed=0)
    ref = jax.block_until_ready(ref)

    assert out.shape == (B, num_class), out.shape
    # Tolerance loosened for bf16 MXU operands (f32 accumulation); structural
    # bugs would show errors >> 5e-2 at these magnitudes.
    np.testing.assert_allclose(np.asarray(out), np.asarray(ref),
                               rtol=5e-2, atol=5e-2)
    print("KERNEL_OK")
</pallas_src>

<mosaic_0001>
module attributes {stable_mosaic.version = 11 : i64} {
  func.func @kernel(%arg0: i32, %arg1: i32, %arg2: memref<7xi32, #tpu.memory_space<smem>>, %arg3: memref<7x4xi32, #tpu.memory_space<smem>>, %arg4: memref<7xi32, #tpu.memory_space<smem>>, %arg5: memref<4x8x128xbf16, #tpu.memory_space<vmem>>, %arg6: memref<1x512x256xbf16, #tpu.memory_space<vmem>>, %arg7: memref<1x1x256xf32, #tpu.memory_space<vmem>>, %arg8: memref<1x256x128xbf16, #tpu.memory_space<vmem>>, %arg9: memref<1x128xf32, #tpu.memory_space<vmem>>, %arg10: memref<8x128xf32, #tpu.memory_space<vmem>>, %arg11: memref<8x256xf32, #tpu.memory_space<vmem>>) attributes {dimension_semantics = [#tpu.dimension_semantics<parallel>, #tpu.dimension_semantics<arbitrary>], iteration_bounds = array<i64: 1, 7>, scalar_prefetch = 3 : i64, scratch_operands = 1 : i64, tpu.core_type = #tpu.core_type<tc>, window_params = [{transform_indices = @transform_0, window_bounds = array<i64: 4, 8, 128>}, {transform_indices = @transform_1, window_bounds = array<i64: 1, 512, 256>}, {transform_indices = @transform_2, window_bounds = array<i64: 1, 1, 256>}, {transform_indices = @transform_3, window_bounds = array<i64: 1, 256, 128>}, {pipeline_mode = #tpu.pipeline_mode<synchronous>, transform_indices = @transform_4, window_bounds = array<i64: 1, 128>}, {transform_indices = @transform_5, window_bounds = array<i64: 8, 128>}]} {
    %c0_i32 = arith.constant 0 : i32
    %0 = arith.cmpi eq, %arg1, %c0_i32 : i32
    %1 = arith.extui %0 : i1 to i32
    %c0_i32_0 = arith.constant 0 : i32
    %2 = arith.cmpi ne, %1, %c0_i32_0 : i32
    scf.if %2 {
      %c0_25 = arith.constant 0 : index
      %c0_26 = arith.constant 0 : index
      %41 = vector.load %arg9[%c0_25, %c0_26] : memref<1x128xf32, #tpu.memory_space<vmem>>, vector<1x128xf32>
      %42 = vector.shape_cast %41 : vector<1x128xf32> to vector<1x128xf32>
      %43 = vector.broadcast %42 : vector<1x128xf32> to vector<8x128xf32>
      %c0_27 = arith.constant 0 : index
      %c0_28 = arith.constant 0 : index
      %44 = vector.load %arg10[%c0_27, %c0_28] : memref<8x128xf32, #tpu.memory_space<vmem>>, vector<8x128xf32>
      tpu.vector_store %arg10[%c0_27, %c0_28], %43 {strides = array<i32>} : memref<8x128xf32, #tpu.memory_space<vmem>>, vector<8x128xf32>,
    } else {
    }
    %3 = arith.index_cast %arg1 : i32 to index
    %c0 = arith.constant 0 : index
    %4 = memref.load %arg3[%3, %c0] : memref<7x4xi32, #tpu.memory_space<smem>>
    %c0_1 = arith.constant 0 : index
    %c0_2 = arith.constant 0 : index
    %c0_3 = arith.constant 0 : index
    %5 = vector.load %arg7[%c0_1, %c0_2, %c0_3] : memref<1x1x256xf32, #tpu.memory_space<vmem>>, vector<1x1x256xf32>
    %6 = vector.shape_cast %5 : vector<1x1x256xf32> to vector<1x256xf32>
    %7 = arith.index_cast %4 : i32 to index
    %c0_4 = arith.constant 0 : index
    %c0_5 = arith.constant 0 : index
    %8 = vector.load %arg5[%7, %c0_4, %c0_5] : memref<4x8x128xbf16, #tpu.memory_space<vmem>>, vector<1x8x128xbf16>
    %9 = vector.shape_cast %8 : vector<1x8x128xbf16> to vector<8x128xbf16>
    %c0_6 = arith.constant 0 : index
    %c0_7 = arith.constant 0 : index
    %c0_8 = arith.constant 0 : index
    %10 = vector.load %arg6[%c0_6, %c0_7, %c0_8] : memref<1x512x256xbf16, #tpu.memory_space<vmem>>, vector<1x128x256xbf16>
    %11 = vector.shape_cast %10 : vector<1x128x256xbf16> to vector<128x256xbf16>
    %cst = arith.constant dense<0.000000e+00> : vector<8x256xf32>
    %12 = tpu.matmul %9, %11, %cst {dimension_numbers = #tpu.dot_dimension_numbers<[1], [0], [0], [1], [0, 0, 1, 1], [], []>} : vector<8x128xbf16>, vector<128x256xbf16>, vector<8x256xf32> -> vector<8x256xf32>
    %13 = vector.broadcast %6 : vector<1x256xf32> to vector<8x256xf32>
    %14 = arith.addf %13, %12 : vector<8x256xf32>
    %c0_9 = arith.constant 0 : index
    %c0_10 = arith.constant 0 : index
    %15 = vector.load %arg11[%c0_9, %c0_10] : memref<8x256xf32, #tpu.memory_space<vmem>>, vector<8x256xf32>
    tpu.vector_store %arg11[%c0_9, %c0_10], %14 {strides = array<i32>} : memref<8x256xf32, #tpu.memory_space<vmem>>, vector<8x256xf32>,
    %16 = arith.index_cast %arg1 : i32 to index
    %17 = memref.load %arg4[%16] : memref<7xi32, #tpu.memory_space<smem>>
    %c1_i32 = arith.constant 1 : i32
    %18 = arith.cmpi sgt, %17, %c1_i32 : i32
    %19 = arith.extui %18 : i1 to i32
    %c0_i32_11 = arith.constant 0 : i32
    %20 = arith.cmpi ne, %19, %c0_i32_11 : i32
    scf.if %20 {
      %41 = arith.index_cast %arg1 : i32 to index
      %c1 = arith.constant 1 : index
      %42 = memref.load %arg3[%41, %c1] : memref<7x4xi32, #tpu.memory_space<smem>>
      %c0_25 = arith.constant 0 : index
      %c0_26 = arith.constant 0 : index
      %43 = vector.load %arg11[%c0_25, %c0_26] : memref<8x256xf32, #tpu.memory_space<vmem>>, vector<8x256xf32>
      %44 = arith.index_cast %42 : i32 to index
      %c0_27 = arith.constant 0 : index
      %c0_28 = arith.constant 0 : index
      %45 = vector.load %arg5[%44, %c0_27, %c0_28] : memref<4x8x128xbf16, #tpu.memory_space<vmem>>, vector<1x8x128xbf16>
      %46 = vector.shape_cast %45 : vector<1x8x128xbf16> to vector<8x128xbf16>
      %c0_29 = arith.constant 0 : index
      %c128 = arith.constant 128 : index
      %c0_30 = arith.constant 0 : index
      %47 = vector.load %arg6[%c0_29, %c128, %c0_30] : memref<1x512x256xbf16, #tpu.memory_space<vmem>>, vector<1x128x256xbf16>
      %48 = vector.shape_cast %47 : vector<1x128x256xbf16> to vector<128x256xbf16>
      %cst_31 = arith.constant dense<0.000000e+00> : vector<8x256xf32>
      %49 = tpu.matmul %46, %48, %cst_31 {dimension_numbers = #tpu.dot_dimension_numbers<[1], [0], [0], [1], [0, 0, 1, 1], [], []>} : vector<8x128xbf16>, vector<128x256xbf16>, vector<8x256xf32> -> vector<8x256xf32>
      %50 = arith.addf %43, %49 : vector<8x256xf32>
      %c0_32 = arith.constant 0 : index
      %c0_33 = arith.constant 0 : index
      %51 = vector.load %arg11[%c0_32, %c0_33] : memref<8x256xf32, #tpu.memory_space<vmem>>, vector<8x256xf32>
      tpu.vector_store %arg11[%c0_32, %c0_33], %50 {strides = array<i32>} : memref<8x256xf32, #tpu.memory_space<vmem>>, vector<8x256xf32>,
    } else {
    }
    %21 = arith.index_cast %arg1 : i32 to index
    %22 = memref.load %arg4[%21] : memref<7xi32, #tpu.memory_space<smem>>
    %c2_i32 = arith.constant 2 : i32
    %23 = arith.cmpi sgt, %22, %c2_i32 : i32
    %24 = arith.extui %23 : i1 to i32
    %c0_i32_12 = arith.constant 0 : i32
    %25 = arith.cmpi ne, %24, %c0_i32_12 : i32
    scf.if %25 {
      %41 = arith.index_cast %arg1 : i32 to index
      %c2 = arith.constant 2 : index
      %42 = memref.load %arg3[%41, %c2] : memref<7x4xi32, #tpu.memory_space<smem>>
      %c0_25 = arith.constant 0 : index
      %c0_26 = arith.constant 0 : index
      %43 = vector.load %arg11[%c0_25, %c0_26] : memref<8x256xf32, #tpu.memory_space<vmem>>, vector<8x256xf32>
      %44 = arith.index_cast %42 : i32 to index
      %c0_27 = arith.constant 0 : index
      %c0_28 = arith.constant 0 : index
      %45 = vector.load %arg5[%44, %c0_27, %c0_28] : memref<4x8x128xbf16, #tpu.memory_space<vmem>>, vector<1x8x128xbf16>
      %46 = vector.shape_cast %45 : vector<1x8x128xbf16> to vector<8x128xbf16>
      %c0_29 = arith.constant 0 : index
      %c256 = arith.constant 256 : index
      %c0_30 = arith.constant 0 : index
      %47 = vector.load %arg6[%c0_29, %c256, %c0_30] : memref<1x512x256xbf16, #tpu.memory_space<vmem>>, vector<1x128x256xbf16>
      %48 = vector.shape_cast %47 : vector<1x128x256xbf16> to vector<128x256xbf16>
      %cst_31 = arith.constant dense<0.000000e+00> : vector<8x256xf32>
      %49 = tpu.matmul %46, %48, %cst_31 {dimension_numbers = #tpu.dot_dimension_numbers<[1], [0], [0], [1], [0, 0, 1, 1], [], []>} : vector<8x128xbf16>, vector<128x256xbf16>, vector<8x256xf32> -> vector<8x256xf32>
      %50 = arith.addf %43, %49 : vector<8x256xf32>
      %c0_32 = arith.constant 0 : index
      %c0_33 = arith.constant 0 : index
      %51 = vector.load %arg11[%c0_32, %c0_33] : memref<8x256xf32, #tpu.memory_space<vmem>>, vector<8x256xf32>
      tpu.vector_store %arg11[%c0_32, %c0_33], %50 {strides = array<i32>} : memref<8x256xf32, #tpu.memory_space<vmem>>, vector<8x256xf32>,
    } else {
    }
    %26 = arith.index_cast %arg1 : i32 to index
    %27 = memref.load %arg4[%26] : memref<7xi32, #tpu.memory_space<smem>>
    %c3_i32 = arith.constant 3 : i32
    %28 = arith.cmpi sgt, %27, %c3_i32 : i32
    %29 = arith.extui %28 : i1 to i32
    %c0_i32_13 = arith.constant 0 : i32
    %30 = arith.cmpi ne, %29, %c0_i32_13 : i32
    scf.if %30 {
      %41 = arith.index_cast %arg1 : i32 to index
      %c3 = arith.constant 3 : index
      %42 = memref.load %arg3[%41, %c3] : memref<7x4xi32, #tpu.memory_space<smem>>
      %c0_25 = arith.constant 0 : index
      %c0_26 = arith.constant 0 : index
      %43 = vector.load %arg11[%c0_25, %c0_26] : memref<8x256xf32, #tpu.memory_space<vmem>>, vector<8x256xf32>
      %44 = arith.index_cast %42 : i32 to index
      %c0_27 = arith.constant 0 : index
      %c0_28 = arith.constant 0 : index
      %45 = vector.load %arg5[%44, %c0_27, %c0_28] : memref<4x8x128xbf16, #tpu.memory_space<vmem>>, vector<1x8x128xbf16>
      %46 = vector.shape_cast %45 : vector<1x8x128xbf16> to vector<8x128xbf16>
      %c0_29 = arith.constant 0 : index
      %c384 = arith.constant 384 : index
      %c0_30 = arith.constant 0 : index
      %47 = vector.load %arg6[%c0_29, %c384, %c0_30] : memref<1x512x256xbf16, #tpu.memory_space<vmem>>, vector<1x128x256xbf16>
      %48 = vector.shape_cast %47 : vector<1x128x256xbf16> to vector<128x256xbf16>
      %cst_31 = arith.constant dense<0.000000e+00> : vector<8x256xf32>
      %49 = tpu.matmul %46, %48, %cst_31 {dimension_numbers = #tpu.dot_dimension_numbers<[1], [0], [0], [1], [0, 0, 1, 1], [], []>} : vector<8x128xbf16>, vector<128x256xbf16>, vector<8x256xf32> -> vector<8x256xf32>
      %50 = arith.addf %43, %49 : vector<8x256xf32>
      %c0_32 = arith.constant 0 : index
      %c0_33 = arith.constant 0 : index
      %51 = vector.load %arg11[%c0_32, %c0_33] : memref<8x256xf32, #tpu.memory_space<vmem>>, vector<8x256xf32>
      tpu.vector_store %arg11[%c0_32, %c0_33], %50 {strides = array<i32>} : memref<8x256xf32, #tpu.memory_space<vmem>>, vector<8x256xf32>,
    } else {
    }
    %c0_14 = arith.constant 0 : index
    %c0_15 = arith.constant 0 : index
    %31 = vector.load %arg11[%c0_14, %c0_15] : memref<8x256xf32, #tpu.memory_space<vmem>>, vector<8x256xf32>
    %cst_16 = arith.constant 0.000000e+00 : f32
    %32 = vector.broadcast %cst_16 : f32 to vector<8x256xf32>
    %33 = arith.maximumf %31, %32 : vector<8x256xf32>
    %34 = arith.truncf %33 : vector<8x256xf32> to vector<8x256xbf16>
    %c0_17 = arith.constant 0 : index
    %c0_18 = arith.constant 0 : index
    %35 = vector.load %arg10[%c0_17, %c0_18] : memref<8x128xf32, #tpu.memory_space<vmem>>, vector<8x128xf32>
    %c0_19 = arith.constant 0 : index
    %c0_20 = arith.constant 0 : index
    %c0_21 = arith.constant 0 : index
    %36 = vector.load %arg8[%c0_19, %c0_20, %c0_21] : memref<1x256x128xbf16, #tpu.memory_space<vmem>>, vector<1x256x128xbf16>
    %37 = vector.shape_cast %36 : vector<1x256x128xbf16> to vector<256x128xbf16>
    %cst_22 = arith.constant dense<0.000000e+00> : vector<8x128xf32>
    %38 = tpu.matmul %34, %37, %cst_22 {dimension_numbers = #tpu.dot_dimension_numbers<[1], [0], [0], [1], [0, 0, 1, 1], [], []>} : vector<8x256xbf16>, vector<256x128xbf16>, vector<8x128xf32> -> vector<8x128xf32>
    %39 = arith.addf %35, %38 : vector<8x128xf32>
    %c0_23 = arith.constant 0 : index
    %c0_24 = arith.constant 0 : index
    %40 = vector.load %arg10[%c0_23, %c0_24] : memref<8x128xf32, #tpu.memory_space<vmem>>, vector<8x128xf32>
    tpu.vector_store %arg10[%c0_23, %c0_24], %39 {strides = array<i32>} : memref<8x128xf32, #tpu.memory_space<vmem>>, vector<8x128xf32>,
    return
  }
  func.func @transform_0(%arg0: i32, %arg1: i32, %arg2: memref<7xi32, #tpu.memory_space<smem>>, %arg3: memref<7x4xi32, #tpu.memory_space<smem>>, %arg4: memref<7xi32, #tpu.memory_space<smem>>) -> (i32, i32, i32) {
    %c0_i32 = arith.constant 0 : i32
    %c0_i32_0 = arith.constant 0 : i32
    %c0_i32_1 = arith.constant 0 : i32
    return %c0_i32, %arg0, %c0_i32_0 : i32, i32, i32
  }
  func.func @transform_1(%arg0: i32, %arg1: i32, %arg2: memref<7xi32, #tpu.memory_space<smem>>, %arg3: memref<7x4xi32, #tpu.memory_space<smem>>, %arg4: memref<7xi32, #tpu.memory_space<smem>>) -> (i32, i32, i32) {
    %0 = arith.index_cast %arg1 : i32 to index
    %1 = memref.load %arg2[%0] : memref<7xi32, #tpu.memory_space<smem>>
    %c0_i32 = arith.constant 0 : i32
    %c0_i32_0 = arith.constant 0 : i32
    %c0_i32_1 = arith.constant 0 : i32
    return %1, %c0_i32, %c0_i32_0 : i32, i32, i32
  }
  func.func @transform_2(%arg0: i32, %arg1: i32, %arg2: memref<7xi32, #tpu.memory_space<smem>>, %arg3: memref<7x4xi32, #tpu.memory_space<smem>>, %arg4: memref<7xi32, #tpu.memory_space<smem>>) -> (i32, i32, i32) {
    %0 = arith.index_cast %arg1 : i32 to index
    %1 = memref.load %arg2[%0] : memref<7xi32, #tpu.memory_space<smem>>
    %c0_i32 = arith.constant 0 : i32
    %c0_i32_0 = arith.constant 0 : i32
    %c0_i32_1 = arith.constant 0 : i32
    return %1, %c0_i32, %c0_i32_0 : i32, i32, i32
  }
  func.func @transform_3(%arg0: i32, %arg1: i32, %arg2: memref<7xi32, #tpu.memory_space<smem>>, %arg3: memref<7x4xi32, #tpu.memory_space<smem>>, %arg4: memref<7xi32, #tpu.memory_space<smem>>) -> (i32, i32, i32) {
    %0 = arith.index_cast %arg1 : i32 to index
    %1 = memref.load %arg2[%0] : memref<7xi32, #tpu.memory_space<smem>>
    %c0_i32 = arith.constant 0 : i32
    %c0_i32_0 = arith.constant 0 : i32
    %c0_i32_1 = arith.constant 0 : i32
    return %1, %c0_i32, %c0_i32_0 : i32, i32, i32
  }
  func.func @transform_4(%arg0: i32, %arg1: i32, %arg2: memref<7xi32, #tpu.memory_space<smem>>, %arg3: memref<7x4xi32, #tpu.memory_space<smem>>, %arg4: memref<7xi32, #tpu.memory_space<smem>>) -> (i32, i32) {
    %c0_i32 = arith.constant 0 : i32
    %c0_i32_0 = arith.constant 0 : i32
    %c0_i32_1 = arith.constant 0 : i32
    return %c0_i32, %c0_i32_0 : i32, i32
  }
  func.func @transform_5(%arg0: i32, %arg1: i32, %arg2: memref<7xi32, #tpu.memory_space<smem>>, %arg3: memref<7x4xi32, #tpu.memory_space<smem>>, %arg4: memref<7xi32, #tpu.memory_space<smem>>) -> (i32, i32) {
    %c0_i32 = arith.constant 0 : i32
    %c0_i32_0 = arith.constant 0 : i32
    return %arg0, %c0_i32 : i32, i32
  }
}

</mosaic_0001>

<llo_original>
// kernel: tpu_custom_call.1
$region0: #{tpu_custom_call.1}
  #allocation0 [shape = 'u32[]', space=smem, size = 0x4, offset = 0x4, fixed_abs, tag = 'smem constant byte address 0x4 - core index']
  #allocation1 [shape = 'u32[144,128]{1,0:T(1,128)}', space=vmem, size = 0x12000, scoped, tag = 'internal scratch']
  #allocation2 [shape = 'f32[8,256]{1,0:T(8,128)}', space=vmem, size = 0x2000, scoped, tag = 'scratch operand']
  #allocation3 [shape = 's32[1]{0}', space=sflag, size = 0x4, scoped, tag = 'scoped memory for tpu_custom_call.1']
  #allocation4 [shape = 'u8[512]{0}', space=smem, size = 0x200, scoped, tag = 'prefetched SMEM operand 0']
  #allocation5 [shape = 'u8[4096]{0}', space=smem, size = 0x1000, scoped, tag = 'prefetched SMEM operand 1']
  #allocation6 [shape = 'u8[512]{0}', space=smem, size = 0x200, scoped, tag = 'prefetched SMEM operand 2']
  %s0 = inlined_call_operand.vmem [shape: s32[7], index: 0, kind: input, shape index: {}]
  %s1 = inlined_call_operand.vmem [shape: s32[7,4], index: 1, kind: input, shape index: {}]
  %s2 = inlined_call_operand.hbm [shape: s32[7], index: 2, kind: input, shape index: {}]
  %s3 = inlined_call_operand.vmem [shape: bf16[4,8,128], index: 3, kind: input, shape index: {}]
  %s4 = inlined_call_operand.hbm [shape: bf16[3,512,256], index: 4, kind: input, shape index: {}]
  %s5 = inlined_call_operand.hbm [shape: f32[3,1,256], index: 5, kind: input, shape index: {}]
  %s6 = inlined_call_operand.hbm [shape: bf16[3,256,128], index: 6, kind: input, shape index: {}]
  %s7 = inlined_call_operand.vmem [shape: f32[1,128], index: 7, kind: input, shape index: {}]
  %s8 = inlined_call_operand.hbm [shape: f32[8,128], index: 8, kind: output, shape index: {}]
  %s9 = sld [smem:[#allocation0]]
  $region81: #{tpu_custom_call.1} parent=0
    _
  %s11 = ssub.s32 1, %s9
  %s12 = scalar_select 0, %s11, %s9
  %s13 = sshll.u32 %s0, 4
  %s14 = int_to_ptr.vmem [resolvable:$true] %s13
  %16 = dma.vmem_to_smem %s14, 16, [#allocation4], [#allocation3]
  %s17 = sshll.u32 %s1, 4
  %s18 = int_to_ptr.vmem [resolvable:$true] %s17
  %20 = dma.vmem_to_smem %s18, 128, [#allocation5], [#allocation3]
  %22 = dma.hbm_to_smem %s2, 16, [#allocation6], [#allocation3]
  %23 = dma.done [#allocation3], 160
  %24 = sfence
  $region1: #{tpu_custom_call.1} parent=0
    #allocation7 [shape = 'u8[524288]{0}', space=vmem, size = 0x80000, scoped, tag = 'input window, operand 4']
    #allocation8 [shape = 's32[2]{0}', space=sflag, size = 0x8, scoped, tag = 'scoped memory for tpu_custom_call.1']
    #allocation9 [shape = 's32[2]{0}', space=sflag, size = 0x8, scoped, tag = 'scoped memory for tpu_custom_call.1']
    #allocation10 [shape = 'u8[2048]{0}', space=vmem, size = 0x800, scoped, tag = 'input window, operand 5']
    #allocation11 [shape = 's32[2]{0}', space=sflag, size = 0x8, scoped, tag = 'scoped memory for tpu_custom_call.1']
    #allocation12 [shape = 'u8[131072]{0}', space=vmem, size = 0x20000, scoped, tag = 'input window, operand 6']
    #allocation13 [shape = 'u8[4096]{0}', space=vmem, size = 0x1000, scoped, tag = 'output window, operand 0, single buffered']
    %25 = vsyncpa [#allocation8], 0
    %s26 = scalar_lea.sflag [#allocation8], 1
    %27 = vsyncpa %s26, 0
    %28 = vsyncpa [#allocation11], 0
    %s29 = scalar_lea.sflag [#allocation11], 1
    %30 = vsyncpa %s29, 0
    %31 = vsyncpa [#allocation9], 0
    loop: start=0, step=1, limit=9
    $region2: #{tpu_custom_call.1} parent=1 // loop_pre_header
      _
    $region3: #{tpu_custom_call.1} parent=1 // loop_header
      %s33 = sphi 0, %s37
      %p34 = scmp.ge.s32.totalorder %s33, 9
      %s40 = sphi 0, %s52
      %s41 = sphi 0, %s48
      %s42 = sphi 0, %s40
      %s43 = sphi 0, %s41
      %s44 = sphi 0, %s42
      %s45 = sphi 0, %s43
      %s55 = sphi 0, %s57
      %s58 = sphi 0, %s55
      %s59 = sphi 0, %s58
      %s75 = sphi 0, %s59
      %s83 = sphi 0, %s85
      %s86 = sphi 0, %s83
      %s87 = sphi 0, %s86
      %s103 = sphi 0, %s87
      %s111 = sphi 0, %s113
      %s114 = sphi 0, %s111
      %s115 = sphi 0, %s114
      %s131 = sphi 0, %s115
      %s139 = sphi 0, %s141
      %s142 = sphi 0, %s139
      %s143 = sphi 0, %s142
      %s159 = sphi 0, %s143
      %s163 = sphi 0, %s163
      %s165 = sphi 0, %s163
      %s166 = sphi 0, %s165
      %s180 = sphi 0, %s166
      %s186 = sphi 0, %s188
      %s189 = sphi 0, %s186
      %s190 = sphi 0, %s189
      %s206 = sphi 0, %s190
    $region4: #{tpu_custom_call.1} parent=1 // loop_header_branch
      %36 = sbr.rel (%p34) target = $region8
    $region5: #{tpu_custom_call.1} parent=1 // loop_body
      %s38 = ssub.s32 %s33, 1
      %s39 = ssub.s32 %s33, 2
      %s46 = sadd.s32 1, %s41
      %p47 = scmp.ge.s32.totalorder %s46, 7
      %s48 = scalar_select %p47, 0, %s46
      %s49 = sadd.s32 1, %s40
      %s50 = scalar_select %p47, %s49, %s40
      %p51 = scmp.ge.s32.totalorder %s50, 1
      %s52 = scalar_select %p51, 0, %s50
      %s53 = ssub.s32 %s40, %s52
      %p54 = scmp.eq.s32.totalorder %s53, 0
      %s56 = sadd.s32 %s55, 1
      %s57 = scalar_select %p54, %s55, %s56
      %p60 = pneg %p54
      %p61 = scmp.eq.s32.totalorder %s33, 6
      %p62 = por %p60, %p61
      %p63 = scmp.ne.s32.totalorder %s55, %s58
      %p64 = scmp.eq.s32.totalorder %s33, 0
      %p65 = por %p63, %p64
      %p66 = scmp.ne.s32.totalorder %s55, %s58
      %p67 = scmp.eq.s32.totalorder %s38, 6
      %p68 = por %p66, %p67
      %p69 = scmp.ne.s32.totalorder %s58, %s59
      %p70 = scmp.eq.s32.totalorder %s38, 0
      %p71 = por %p69, %p70
      %p72 = scmp.ne.s32.totalorder %s58, %s59
      %p73 = scmp.eq.s32.totalorder %s39, 6
      %p74 = por %p72, %p73
      %p76 = scmp.ne.s32.totalorder %s59, %s75
      %p77 = scmp.eq.s32.totalorder %s39, 0
      %p78 = por %p76, %p77
      %s79 = sld [smem:[#allocation4 + %s41]]
      %s80 = sld [smem:[#allocation4 + %s48]]
      %s81 = ssub.s32 %s79, %s80
      %p82 = scmp.eq.s32.totalorder %s81, 0
      %s84 = sadd.s32 %s83, 1
      %s85 = scalar_select %p82, %s83, %s84
      %p88 = pneg %p82
      %p89 = scmp.eq.s32.totalorder %s33, 6
      %p90 = por %p88, %p89
      %p91 = scmp.ne.s32.totalorder %s83, %s86
      %p92 = scmp.eq.s32.totalorder %s33, 0
      %p93 = por %p91, %p92
      %p94 = scmp.ne.s32.totalorder %s83, %s86
      %p95 = scmp.eq.s32.totalorder %s38, 6
      %p96 = por %p94, %p95
      %p97 = scmp.ne.s32.totalorder %s86, %s87
      %p98 = scmp.eq.s32.totalorder %s38, 0
      %p99 = por %p97, %p98
      %p100 = scmp.ne.s32.totalorder %s86, %s87
      %p101 = scmp.eq.s32.totalorder %s39, 6
      %p102 = por %p100, %p101
      %p104 = scmp.ne.s32.totalorder %s87, %s103
      %p105 = scmp.eq.s32.totalorder %s39, 0
      %p106 = por %p104, %p105
      %s107 = sld [smem:[#allocation4 + %s41]]
      %s108 = sld [smem:[#allocation4 + %s48]]
      %s109 = ssub.s32 %s107, %s108
      %p110 = scmp.eq.s32.totalorder %s109, 0
      %s112 = sadd.s32 %s111, 1
      %s113 = scalar_select %p110, %s111, %s112
      %p116 = pneg %p110
      %p117 = scmp.eq.s32.totalorder %s33, 6
      %p118 = por %p116, %p117
      %p119 = scmp.ne.s32.totalorder %s111, %s114
      %p120 = scmp.eq.s32.totalorder %s33, 0
      %p121 = por %p119, %p120
      %p122 = scmp.ne.s32.totalorder %s111, %s114
      %p123 = scmp.eq.s32.totalorder %s38, 6
      %p124 = por %p122, %p123
      %p125 = scmp.ne.s32.totalorder %s114, %s115
      %p126 = scmp.eq.s32.totalorder %s38, 0
      %p127 = por %p125, %p126
      %p128 = scmp.ne.s32.totalorder %s114, %s115
      %p129 = scmp.eq.s32.totalorder %s39, 6
      %p130 = por %p128, %p129
      %p132 = scmp.ne.s32.totalorder %s115, %s131
      %p133 = scmp.eq.s32.totalorder %s39, 0
      %p134 = por %p132, %p133
      %s135 = sld [smem:[#allocation4 + %s41]]
      %s136 = sld [smem:[#allocation4 + %s48]]
      %s137 = ssub.s32 %s135, %s136
      %p138 = scmp.eq.s32.totalorder %s137, 0
      %s140 = sadd.s32 %s139, 1
      %s141 = scalar_select %p138, %s139, %s140
      %p144 = pneg %p138
      %p145 = scmp.eq.s32.totalorder %s33, 6
      %p146 = por %p144, %p145
      %p147 = scmp.ne.s32.totalorder %s139, %s142
      %p148 = scmp.eq.s32.totalorder %s33, 0
      %p149 = por %p147, %p148
      %p150 = scmp.ne.s32.totalorder %s139, %s142
      %p151 = scmp.eq.s32.totalorder %s38, 6
      %p152 = por %p150, %p151
      %p153 = scmp.ne.s32.totalorder %s142, %s143
      %p154 = scmp.eq.s32.totalorder %s38, 0
      %p155 = por %p153, %p154
      %p156 = scmp.ne.s32.totalorder %s142, %s143
      %p157 = scmp.eq.s32.totalorder %s39, 6
      %p158 = por %p156, %p157
      %p160 = scmp.ne.s32.totalorder %s143, %s159
      %p161 = scmp.eq.s32.totalorder %s39, 0
      %p162 = por %p160, %p161
      %s164 = sadd.s32 %s163, 1
      %p167 = scmp.eq.s32.totalorder %s33, 6
      %p168 = scmp.ne.s32.totalorder %s163, %s165
      %p169 = scmp.eq.s32.totalorder %s33, 0
      %p170 = por %p168, %p169
      %p171 = scmp.ne.s32.totalorder %s163, %s165
      %p172 = scmp.eq.s32.totalorder %s38, 6
      %p173 = por %p171, %p172
      %p174 = scmp.ne.s32.totalorder %s165, %s166
      %p175 = scmp.eq.s32.totalorder %s38, 0
      %p176 = por %p174, %p175
      %p177 = scmp.ne.s32.totalorder %s165, %s166
      %p178 = scmp.eq.s32.totalorder %s39, 6
      %p179 = por %p177, %p178
      %p181 = scmp.ne.s32.totalorder %s166, %s180
      %p182 = scmp.eq.s32.totalorder %s39, 0
      %p183 = por %p181, %p182
      %s184 = ssub.s32 %s40, %s52
      %p185 = scmp.eq.s32.totalorder %s184, 0
      %s187 = sadd.s32 %s186, 1
      %s188 = scalar_select %p185, %s186, %s187
      %p191 = pneg %p185
      %p192 = scmp.eq.s32.totalorder %s33, 6
      %p193 = por %p191, %p192
      %p194 = scmp.ne.s32.totalorder %s186, %s189
      %p195 = scmp.eq.s32.totalorder %s33, 0
      %p196 = por %p194, %p195
      %p197 = scmp.ne.s32.totalorder %s186, %s189
      %p198 = scmp.eq.s32.totalorder %s38, 6
      %p199 = por %p197, %p198
      %p200 = scmp.ne.s32.totalorder %s189, %s190
      %p201 = scmp.eq.s32.totalorder %s38, 0
      %p202 = por %p200, %p201
      %p203 = scmp.ne.s32.totalorder %s189, %s190
      %p204 = scmp.eq.s32.totalorder %s39, 6
      %p205 = por %p203, %p204
      %p207 = scmp.ne.s32.totalorder %s190, %s206
      %p208 = scmp.eq.s32.totalorder %s39, 0
      %p209 = por %p207, %p208
      %p210 = scmp.le.s32.totalorder 1, %s33
      %p211 = scmp.lt.s32.totalorder %s33, 8
      %p212 = pnand %p210, %p211
      %p213 = pneg %p212
      // Predicated region
      $region9: #{tpu_custom_call.1} parent=5 // pred_check
        _
      $region10: #{tpu_custom_call.1} parent=5 // pred_check_branch
        %215 = sbr.rel (%p212) target = $region12
      $region11: #{tpu_custom_call.1} parent=5 // pred_region
        %s216 = ssub.s32 %s33, 1
        // Predicated region
        $region13: #{tpu_custom_call.1} parent=11 // pred_check
          %p217 = pneg %p71
        $region14: #{tpu_custom_call.1} parent=11 // pred_check_branch
          %219 = sbr.rel (%p217) target = $region16
        $region15: #{tpu_custom_call.1} parent=11 // pred_region
          %p220 = scmp.lt.s32.totalorder %s42, 0
          %s221 = scalar_select %p220, %s42, 0
          %s222 = smul.addr %s221, 4
          %s223 = scalar_lea.vmem %s3, %s222
        $region16: #{tpu_custom_call.1} parent=11 // pred_fallthru
          _
        // Predicated region
        $region17: #{tpu_custom_call.1} parent=11 // pred_check
          %p224 = pneg %p176
        $region18: #{tpu_custom_call.1} parent=11 // pred_check_branch
          %226 = sbr.rel (%p224) target = $region20
        $region19: #{tpu_custom_call.1} parent=11 // pred_region
          _
        $region20: #{tpu_custom_call.1} parent=11 // pred_fallthru
          _
      $region12: #{tpu_custom_call.1} parent=5 // pred_fallthru
        _
      %p227 = scmp.lt.s32.totalorder %s33, 7
      // Predicated region
      $region21: #{tpu_custom_call.1} parent=5 // pred_check
        %p228 = pneg %p227
      $region22: #{tpu_custom_call.1} parent=5 // pred_check_branch
        %230 = sbr.rel (%p228) target = $region24
      $region23: #{tpu_custom_call.1} parent=5 // pred_region
        // Predicated region
        $region25: #{tpu_custom_call.1} parent=23 // pred_check
          %p231 = pneg %p93
        $region26: #{tpu_custom_call.1} parent=23 // pred_check_branch
          %233 = sbr.rel (%p231) target = $region28
        $region27: #{tpu_custom_call.1} parent=23 // pred_region
          %s234 = sand.u32 %s83, 1
          %s235 = scalar_lea.sflag [#allocation8], %s234
          %s236 = sand.u32 %s83, 1
          %s237 = smul.addr %s236, 512
          %s238 = scalar_lea.vmem [#allocation7], %s237
          %s239 = sld [smem:[#allocation4 + %s41]]
          %s241 = ssub.s32 8192, 8192
          %242 = vsyncadd %s235, %s241
          %s243 = smul.addr %s239, 128
          %s244 = smul.addr %s243, 64
          %s245 = scalar_lea.hbm %s4, %s244
          %s246 = sshll.u32 %s238, 4
          %s247 = int_to_ptr.vmem [resolvable:$true] %s246
          %252 = dma.hbm_to_vmem [thread:$0]  %s245, 8192, %s247, %s235, 128, 128, 8
        $region28: #{tpu_custom_call.1} parent=23 // pred_fallthru
          _
        // Predicated region
        $region29: #{tpu_custom_call.1} parent=23 // pred_check
          %p253 = pneg %p121
        $region30: #{tpu_custom_call.1} parent=23 // pred_check_branch
          %255 = sbr.rel (%p253) target = $region32
        $region31: #{tpu_custom_call.1} parent=23 // pred_region
          %s256 = sand.u32 %s33, 1
          %s257 = scalar_lea.sflag [#allocation11], %s256
          %s258 = sand.u32 %s111, 1
          %s259 = smul.addr %s258, 2
          %s260 = scalar_lea.vmem [#allocation10], %s259
          %s261 = sld [smem:[#allocation4 + %s41]]
          %s263 = ssub.s32 32, 32
          %264 = vsyncadd %s257, %s263
          %s265 = smul.addr %s261, 2
          %s266 = smul.addr %s265, 16
          %s267 = scalar_lea.hbm %s5, %s266
          %s269 = sshll.u32 %s260, 4
          %s270 = int_to_ptr.vmem [resolvable:$true] %s269
          %272 = dma.hbm_to_vmem [thread:$0]  %s267, 32, %s270, %s257
        $region32: #{tpu_custom_call.1} parent=23 // pred_fallthru
          _
        // Predicated region
        $region33: #{tpu_custom_call.1} parent=23 // pred_check
          %p273 = pneg %p149
        $region34: #{tpu_custom_call.1} parent=23 // pred_check_branch
          %275 = sbr.rel (%p273) target = $region36
        $region35: #{tpu_custom_call.1} parent=23 // pred_region
          %s276 = sand.u32 %s33, 1
          %s277 = scalar_lea.sflag [#allocation11], %s276
          %s278 = sand.u32 %s139, 1
          %s279 = smul.addr %s278, 128
          %s280 = scalar_lea.vmem [#allocation12], %s279
          %s281 = sld [smem:[#allocation4 + %s41]]
          %s283 = ssub.s32 2048, 2048
          %284 = vsyncadd %s277, %s283
          %s285 = smul.addr %s281, 32
          %s286 = smul.addr %s285, 64
          %s287 = scalar_lea.hbm %s6, %s286
          %s288 = sshll.u32 %s280, 4
          %s289 = int_to_ptr.vmem [resolvable:$true] %s288
          %294 = dma.hbm_to_vmem [thread:$0]  %s287, 2048, %s289, %s277, 64, 64, 4
        $region36: #{tpu_custom_call.1} parent=23 // pred_fallthru
          _
      $region24: #{tpu_custom_call.1} parent=5 // pred_fallthru
        _
      %p295 = scmp.le.s32.totalorder 1, %s33
      %p296 = scmp.lt.s32.totalorder %s33, 8
      %p297 = pnand %p295, %p296
      %p298 = pneg %p297
      // Predicated region
      $region37: #{tpu_custom_call.1} parent=5 // pred_check
        _
      $region38: #{tpu_custom_call.1} parent=5 // pred_check_branch
        %300 = sbr.rel (%p297) target = $region40
      $region39: #{tpu_custom_call.1} parent=5 // pred_region
        %s301 = ssub.s32 %s33, 1
        %s302 = sand.u32 %s86, 1
        %s303 = scalar_lea.sflag [#allocation8], %s302
        %s304 = sand.u32 %s86, 1
        %s305 = smul.addr %s304, 512
        %s306 = scalar_lea.vmem [#allocation7], %s305
        // Predicated region
        $region41: #{tpu_custom_call.1} parent=39 // pred_check
          %p307 = pneg %p99
        $region42: #{tpu_custom_call.1} parent=39 // pred_check_branch
          %309 = sbr.rel (%p307) target = $region44
        $region43: #{tpu_custom_call.1} parent=39 // pred_region
          %310 = dma.done %s303, 8192
        $region44: #{tpu_custom_call.1} parent=39 // pred_fallthru
          _
        %s311 = sand.u32 %s38, 1
        %s312 = scalar_lea.sflag [#allocation11], %s311
        %s313 = sand.u32 %s114, 1
        %s314 = smul.addr %s313, 2
        %s315 = scalar_lea.vmem [#allocation10], %s314
        // Predicated region
        $region45: #{tpu_custom_call.1} parent=39 // pred_check
          %p316 = pneg %p127
        $region46: #{tpu_custom_call.1} parent=39 // pred_check_branch
          %318 = sbr.rel (%p316) target = $region48
        $region47: #{tpu_custom_call.1} parent=39 // pred_region
          %319 = dma.done %s312, 32
        $region48: #{tpu_custom_call.1} parent=39 // pred_fallthru
          _
        %s320 = sand.u32 %s38, 1
        %s321 = scalar_lea.sflag [#allocation11], %s320
        %s322 = sand.u32 %s142, 1
        %s323 = smul.addr %s322, 128
        %s324 = scalar_lea.vmem [#allocation12], %s323
        // Predicated region
        $region49: #{tpu_custom_call.1} parent=39 // pred_check
          %p325 = pneg %p155
        $region50: #{tpu_custom_call.1} parent=39 // pred_check_branch
          %327 = sbr.rel (%p325) target = $region52
        $region51: #{tpu_custom_call.1} parent=39 // pred_region
          %328 = dma.done %s321, 2048
        $region52: #{tpu_custom_call.1} parent=39 // pred_fallthru
          _
        %p329 = scmp.lt.s32.totalorder %s42, 0
        %s330 = scalar_select %p329, %s42, 0
        %s331 = smul.addr %s330, 4
        %s332 = scalar_lea.vmem %s3, %s331
        %p333 = pneg %p71
        %p334 = pneg %p68
        %s335 = sand.u32 %s86, 1
        %s336 = scalar_lea.sflag [#allocation8], %s335
        %s337 = sand.u32 %s86, 1
        %s338 = smul.addr %s337, 512
        %s339 = scalar_lea.vmem [#allocation7], %s338
        %p340 = pneg %p99
        %p341 = pneg %p96
        %s342 = sand.u32 %s38, 1
        %s343 = scalar_lea.sflag [#allocation11], %s342
        %s344 = sand.u32 %s114, 1
        %s345 = smul.addr %s344, 2
        %s346 = scalar_lea.vmem [#allocation10], %s345
        %p347 = pneg %p127
        %p348 = pneg %p124
        %s349 = sand.u32 %s38, 1
        %s350 = scalar_lea.sflag [#allocation11], %s349
        %s351 = sand.u32 %s142, 1
        %s352 = smul.addr %s351, 128
        %s353 = scalar_lea.vmem [#allocation12], %s352
        %p354 = pneg %p155
        %p355 = pneg %p152
        %p356 = pneg %p176
        %p357 = pneg %p173
        %p358 = pneg %p202
        %p359 = pneg %p199
        %p360 = scmp.lt.s32.totalorder %s42, 0
        %s361 = scalar_select %p360, %s42, 0
        %s362 = smul.addr %s361, 4
        %s363 = scalar_lea.vmem %s3, %s362
        %s364 = sld [smem:[#allocation4 + %s43]]
        %s365 = sld [smem:[#allocation4 + %s43]]
        %s366 = sld [smem:[#allocation4 + %s43]]
        %p368 = scmp.eq.s32.totalorder %s43, 0
        // Predicated region
        $region53: #{tpu_custom_call.1} parent=39 // pred_check
          %p369 = pneg %p368
        $region54: #{tpu_custom_call.1} parent=39 // pred_check_branch
          %371 = sbr.rel (%p369) target = $region56
        $region55: #{tpu_custom_call.1} parent=39 // pred_region
          %v372 = vld [vmem:[%s7] sm:$0x1]
          %v374 = vlaneseq
          %v375 = vshrl.u32 %v374, 7
          %v376 = vsub.s32 0, %v375
          %v377 = vrot.slane %v372, %v376
          %379 = vst [vmem:[#allocation13] sm:$0xff] %v377
        $region56: #{tpu_custom_call.1} parent=39 // pred_fallthru
          _
        %s380 = smul.u32 %s43, 128
        %s381 = sld [smem:[#allocation5 + %s380]]
        %v382 = vld [vmem:[%s315] sm:$0x3]
        %s383 = smul.addr %s381, 4
        %s384 = scalar_lea.vmem %s363, %s383
        %v385 = vld [vmem:[%s384] sm:$0xf]
        %v386 = vld [vmem:[%s306] sm:$0xff]
        %v387 = vld [vmem:[%s306 + $0x8] sm:$0xff]
        %v388 = vld [vmem:[%s306 + $0x10] sm:$0xff]
        %v389 = vld [vmem:[%s306 + $0x18] sm:$0xff]
        %v390 = vld [vmem:[%s306 + $0x20] sm:$0xff]
        %v391 = vld [vmem:[%s306 + $0x28] sm:$0xff]
        %v392 = vld [vmem:[%s306 + $0x30] sm:$0xff]
        %v393 = vld [vmem:[%s306 + $0x38] sm:$0xff]
        %v394 = vld [vmem:[%s306 + $0x40] sm:$0xff]
        %v395 = vld [vmem:[%s306 + $0x48] sm:$0xff]
        %v396 = vld [vmem:[%s306 + $0x50] sm:$0xff]
        %v397 = vld [vmem:[%s306 + $0x58] sm:$0xff]
        %v398 = vld [vmem:[%s306 + $0x60] sm:$0xff]
        %v399 = vld [vmem:[%s306 + $0x68] sm:$0xff]
        %v400 = vld [vmem:[%s306 + $0x70] sm:$0xff]
        %v401 = vld [vmem:[%s306 + $0x78] sm:$0xff]
        %v418 = vunpack.c.l.b16 %v386
        %v419 = vunpack.c.h.b16 %v386
        %v420 = vunpack.c.l.b16 %v387
        %v421 = vunpack.c.h.b16 %v387
        %v422 = vunpack.c.l.b16 %v388
        %v423 = vunpack.c.h.b16 %v388
        %v424 = vunpack.c.l.b16 %v389
        %v425 = vunpack.c.h.b16 %v389
        %v426 = vunpack.c.l.b16 %v390
        %v427 = vunpack.c.h.b16 %v390
        %v428 = vunpack.c.l.b16 %v391
        %v429 = vunpack.c.h.b16 %v391
        %v430 = vunpack.c.l.b16 %v392
        %v431 = vunpack.c.h.b16 %v392
        %v432 = vunpack.c.l.b16 %v393
        %v433 = vunpack.c.h.b16 %v393
        %v434 = vunpack.c.l.b16 %v394
        %v435 = vunpack.c.h.b16 %v394
        %v436 = vunpack.c.l.b16 %v395
        %v437 = vunpack.c.h.b16 %v395
        %v438 = vunpack.c.l.b16 %v396
        %v439 = vunpack.c.h.b16 %v396
        %v440 = vunpack.c.l.b16 %v397
        %v441 = vunpack.c.h.b16 %v397
        %v442 = vunpack.c.l.b16 %v398
        %v443 = vunpack.c.h.b16 %v398
        %v444 = vunpack.c.l.b16 %v399
        %v445 = vunpack.c.h.b16 %v399
        %v446 = vunpack.c.l.b16 %v400
        %v447 = vunpack.c.h.b16 %v400
        %v448 = vunpack.c.l.b16 %v401
        %v449 = vunpack.c.h.b16 %v401
        %v450 = vpack.c.b16 %v420, %v418
        %v451 = vpack.c.b16 %v421, %v419
        %v452 = vpack.c.b16 %v424, %v422
        %v453 = vpack.c.b16 %v425, %v423
        %v454 = vpack.c.b16 %v428, %v426
        %v455 = vpack.c.b16 %v429, %v427
        %v456 = vpack.c.b16 %v432, %v430
        %v457 = vpack.c.b16 %v433, %v431
        %v458 = vpack.c.b16 %v436, %v434
        %v459 = vpack.c.b16 %v437, %v435
        %v460 = vpack.c.b16 %v440, %v438
        %v461 = vpack.c.b16 %v441, %v439
        %v462 = vpack.c.b16 %v444, %v442
        %v463 = vpack.c.b16 %v445, %v443
        %v464 = vpack.c.b16 %v448, %v446
        %v465 = vpack.c.b16 %v449, %v447
        %482 = vmatprep.subr.bf16.mxu0 %v465
        %483 = vmatpush1.bf16.msra.mxu0 %v464
        %484 = vmatprep.subr.bf16.mxu0 %v463
        %485 = vmatpush1.bf16.msra.mxu0 %v462
        %486 = vmatprep.subr.bf16.mxu0 %v461
        %487 = vmatpush1.bf16.msra.mxu0 %v460
        %488 = vmatprep.subr.bf16.mxu0 %v459
        %489 = vmatpush1.bf16.msra.mxu0 %v458
        %490 = vmatprep.subr.bf16.mxu0 %v457
        %491 = vmatpush1.bf16.msra.mxu0 %v456
        %492 = vmatprep.subr.bf16.mxu0 %v455
        %493 = vmatpush1.bf16.msra.mxu0 %v454
        %494 = vmatprep.subr.bf16.mxu0 %v453
        %495 = vmatpush1.bf16.msra.mxu0 %v452
        %496 = vmatprep.subr.bf16.mxu0 %v451
        %497 = vmatpush1.bf16.msra.mxu0 %v450
        %498 = vmatprep.subr.bf16.mxu0 0
        %499 = vmatpush2.bf16.msra.mxu0 0
        %500 = vmatprep.subr.bf16.mxu0 0
        %501 = vmatpush2.bf16.msra.mxu0 0
        %502 = vmatprep.subr.bf16.mxu0 0
        %503 = vmatpush2.bf16.msra.mxu0 0
        %504 = vmatprep.subr.bf16.mxu0 0
        %505 = vmatpush2.bf16.msra.mxu0 0
        %506 = vmatprep.subr.bf16.mxu0 0
        %507 = vmatpush2.bf16.msra.mxu0 0
        %508 = vmatprep.subr.bf16.mxu0 0
        %509 = vmatpush2.bf16.msra.mxu0 0
        %510 = vmatprep.subr.bf16.mxu0 0
        %511 = vmatpush2.bf16.msra.mxu0 0
        %512 = vmatprep.subr.bf16.mxu0 0
        %513 = vmatpush2.bf16.msra.mxu0 0
        %514 = vmatprep.mubr.bf16.mxu0 0
        %515 = vmatmul.mubr.bf16.gmra.mxu0 %v385
        %v516 = vpop.f32.mrf.mxu0
        %v517 = vadd.f32 0.0, %v516
        %v518 = vpop.f32.mrf.mxu0
        %v519 = vadd.f32 0.0, %v518
        %v520 = vpop.f32.mrf.mxu0
        %v521 = vpop.f32.mrf.mxu0
        %522 = vdwg.mxu0
        %v524 = vlaneseq
        %v525 = vshrl.u32 %v524, 7
        %v526 = vsub.s32 0, %v525
        %v527 = vrot.slane %v382, %v526
        %v528 = vlaneseq
        %v529 = vshrl.u32 %v528, 7
        %v530 = vsub.s32 1, %v529
        %v531 = vrot.slane %v382, %v530
        %v534 = vadd.f32 %v527, %v517
        %v535 = vadd.f32 %v531, %v519
        %536 = vst [vmem:[#allocation2] sm:$0xff] %v534
        %537 = vst [vmem:[#allocation2 + $0x8] sm:$0xff] %v535
        %s538 = sld [smem:[#allocation6 + %s43]]
        %p539 = scmp.gt.s32.totalorder %s538, 1
        // Predicated region
        $region57: #{tpu_custom_call.1} parent=39 // pred_check
          %p540 = pneg %p539
        $region58: #{tpu_custom_call.1} parent=39 // pred_check_branch
          %542 = sbr.rel (%p540) target = $region60
        $region59: #{tpu_custom_call.1} parent=39 // pred_region
          %s543 = sadd.s32 %s380, 1
          %s544 = sld [smem:[#allocation5 + %s543]]
          %v545 = vld [vmem:[#allocation2] sm:$0xff]
          %v546 = vld [vmem:[#allocation2 + $0x8] sm:$0xff]
          %s547 = smul.addr %s544, 4
          %s548 = scalar_lea.vmem %s363, %s547
          %v549 = vld [vmem:[%s548] sm:$0xf]
          %v550 = vld [vmem:[%s306 + $0x80] sm:$0xff]
          %v551 = vld [vmem:[%s306 + $0x88] sm:$0xff]
          %v552 = vld [vmem:[%s306 + $0x90] sm:$0xff]
          %v553 = vld [vmem:[%s306 + $0x98] sm:$0xff]
          %v554 = vld [vmem:[%s306 + $0xa0] sm:$0xff]
          %v555 = vld [vmem:[%s306 + $0xa8] sm:$0xff]
          %v556 = vld [vmem:[%s306 + $0xb0] sm:$0xff]
          %v557 = vld [vmem:[%s306 + $0xb8] sm:$0xff]
          %v558 = vld [vmem:[%s306 + $0xc0] sm:$0xff]
          %v559 = vld [vmem:[%s306 + $0xc8] sm:$0xff]
          %v560 = vld [vmem:[%s306 + $0xd0] sm:$0xff]
          %v561 = vld [vmem:[%s306 + $0xd8] sm:$0xff]
          %v562 = vld [vmem:[%s306 + $0xe0] sm:$0xff]
          %v563 = vld [vmem:[%s306 + $0xe8] sm:$0xff]
          %v564 = vld [vmem:[%s306 + $0xf0] sm:$0xff]
          %v565 = vld [vmem:[%s306 + $0xf8] sm:$0xff]
          %v582 = vunpack.c.l.b16 %v550
          %v583 = vunpack.c.h.b16 %v550
          %v584 = vunpack.c.l.b16 %v551
          %v585 = vunpack.c.h.b16 %v551
          %v586 = vunpack.c.l.b16 %v552
          %v587 = vunpack.c.h.b16 %v552
          %v588 = vunpack.c.l.b16 %v553
          %v589 = vunpack.c.h.b16 %v553
          %v590 = vunpack.c.l.b16 %v554
          %v591 = vunpack.c.h.b16 %v554
          %v592 = vunpack.c.l.b16 %v555
          %v593 = vunpack.c.h.b16 %v555
          %v594 = vunpack.c.l.b16 %v556
          %v595 = vunpack.c.h.b16 %v556
          %v596 = vunpack.c.l.b16 %v557
          %v597 = vunpack.c.h.b16 %v557
          %v598 = vunpack.c.l.b16 %v558
          %v599 = vunpack.c.h.b16 %v558
          %v600 = vunpack.c.l.b16 %v559
          %v601 = vunpack.c.h.b16 %v559
          %v602 = vunpack.c.l.b16 %v560
          %v603 = vunpack.c.h.b16 %v560
          %v604 = vunpack.c.l.b16 %v561
          %v605 = vunpack.c.h.b16 %v561
          %v606 = vunpack.c.l.b16 %v562
          %v607 = vunpack.c.h.b16 %v562
          %v608 = vunpack.c.l.b16 %v563
          %v609 = vunpack.c.h.b16 %v563
          %v610 = vunpack.c.l.b16 %v564
          %v611 = vunpack.c.h.b16 %v564
          %v612 = vunpack.c.l.b16 %v565
          %v613 = vunpack.c.h.b16 %v565
          %v614 = vpack.c.b16 %v584, %v582
          %v615 = vpack.c.b16 %v585, %v583
          %v616 = vpack.c.b16 %v588, %v586
          %v617 = vpack.c.b16 %v589, %v587
          %v618 = vpack.c.b16 %v592, %v590
          %v619 = vpack.c.b16 %v593, %v591
          %v620 = vpack.c.b16 %v596, %v594
          %v621 = vpack.c.b16 %v597, %v595
          %v622 = vpack.c.b16 %v600, %v598
          %v623 = vpack.c.b16 %v601, %v599
          %v624 = vpack.c.b16 %v604, %v602
          %v625 = vpack.c.b16 %v605, %v603
          %v626 = vpack.c.b16 %v608, %v606
          %v627 = vpack.c.b16 %v609, %v607
          %v628 = vpack.c.b16 %v612, %v610
          %v629 = vpack.c.b16 %v613, %v611
          %646 = vmatprep.subr.bf16.mxu0 %v629
          %647 = vmatpush1.bf16.msra.mxu0 %v628
          %648 = vmatprep.subr.bf16.mxu0 %v627
          %649 = vmatpush1.bf16.msra.mxu0 %v626
          %650 = vmatprep.subr.bf16.mxu0 %v625
          %651 = vmatpush1.bf16.msra.mxu0 %v624
          %652 = vmatprep.subr.bf16.mxu0 %v623
          %653 = vmatpush1.bf16.msra.mxu0 %v622
          %654 = vmatprep.subr.bf16.mxu0 %v621
          %655 = vmatpush1.bf16.msra.mxu0 %v620
          %656 = vmatprep.subr.bf16.mxu0 %v619
          %657 = vmatpush1.bf16.msra.mxu0 %v618
          %658 = vmatprep.subr.bf16.mxu0 %v617
          %659 = vmatpush1.bf16.msra.mxu0 %v616
          %660 = vmatprep.subr.bf16.mxu0 %v615
          %661 = vmatpush1.bf16.msra.mxu0 %v614
          %662 = vmatprep.subr.bf16.mxu0 0
          %663 = vmatpush2.bf16.msra.mxu0 0
          %664 = vmatprep.subr.bf16.mxu0 0
          %665 = vmatpush2.bf16.msra.mxu0 0
          %666 = vmatprep.subr.bf16.mxu0 0
          %667 = vmatpush2.bf16.msra.mxu0 0
          %668 = vmatprep.subr.bf16.mxu0 0
          %669 = vmatpush2.bf16.msra.mxu0 0
          %670 = vmatprep.subr.bf16.mxu0 0
          %671 = vmatpush2.bf16.msra.mxu0 0
          %672 = vmatprep.subr.bf16.mxu0 0
          %673 = vmatpush2.bf16.msra.mxu0 0
          %674 = vmatprep.subr.bf16.mxu0 0
          %675 = vmatpush2.bf16.msra.mxu0 0
          %676 = vmatprep.subr.bf16.mxu0 0
          %677 = vmatpush2.bf16.msra.mxu0 0
          %678 = vmatprep.mubr.bf16.mxu0 0
          %679 = vmatmul.mubr.bf16.gmra.mxu0 %v549
          %v680 = vpop.f32.mrf.mxu0
          %v681 = vadd.f32 0.0, %v680
          %v682 = vpop.f32.mrf.mxu0
          %v683 = vadd.f32 0.0, %v682
          %v684 = vpop.f32.mrf.mxu0
          %v685 = vpop.f32.mrf.mxu0
          %686 = vdwg.mxu0
          %v687 = vadd.f32 %v545, %v681
          %v688 = vadd.f32 %v546, %v683
          %689 = vst [vmem:[#allocation2] sm:$0xff] %v687
          %690 = vst [vmem:[#allocation2 + $0x8] sm:$0xff] %v688
        $region60: #{tpu_custom_call.1} parent=39 // pred_fallthru
          _
        %s691 = sld [smem:[#allocation6 + %s43]]
        %p692 = scmp.gt.s32.totalorder %s691, 2
        // Predicated region
        $region61: #{tpu_custom_call.1} parent=39 // pred_check
          %p693 = pneg %p692
        $region62: #{tpu_custom_call.1} parent=39 // pred_check_branch
          %695 = sbr.rel (%p693) target = $region64
        $region63: #{tpu_custom_call.1} parent=39 // pred_region
          %s696 = sadd.s32 %s380, 2
          %s697 = sld [smem:[#allocation5 + %s696]]
          %v698 = vld [vmem:[#allocation2] sm:$0xff]
          %v699 = vld [vmem:[#allocation2 + $0x8] sm:$0xff]
          %s700 = smul.addr %s697, 4
          %s701 = scalar_lea.vmem %s363, %s700
          %v702 = vld [vmem:[%s701] sm:$0xf]
          %v703 = vld [vmem:[%s306 + $0x100] sm:$0xff]
          %v704 = vld [vmem:[%s306 + $0x108] sm:$0xff]
          %v705 = vld [vmem:[%s306 + $0x110] sm:$0xff]
          %v706 = vld [vmem:[%s306 + $0x118] sm:$0xff]
          %v707 = vld [vmem:[%s306 + $0x120] sm:$0xff]
          %v708 = vld [vmem:[%s306 + $0x128] sm:$0xff]
          %v709 = vld [vmem:[%s306 + $0x130] sm:$0xff]
          %v710 = vld [vmem:[%s306 + $0x138] sm:$0xff]
          %v711 = vld [vmem:[%s306 + $0x140] sm:$0xff]
          %v712 = vld [vmem:[%s306 + $0x148] sm:$0xff]
          %v713 = vld [vmem:[%s306 + $0x150] sm:$0xff]
          %v714 = vld [vmem:[%s306 + $0x158] sm:$0xff]
          %v715 = vld [vmem:[%s306 + $0x160] sm:$0xff]
          %v716 = vld [vmem:[%s306 + $0x168] sm:$0xff]
          %v717 = vld [vmem:[%s306 + $0x170] sm:$0xff]
          %v718 = vld [vmem:[%s306 + $0x178] sm:$0xff]
          %v735 = vunpack.c.l.b16 %v703
          %v736 = vunpack.c.h.b16 %v703
          %v737 = vunpack.c.l.b16 %v704
          %v738 = vunpack.c.h.b16 %v704
          %v739 = vunpack.c.l.b16 %v705
          %v740 = vunpack.c.h.b16 %v705
          %v741 = vunpack.c.l.b16 %v706
          %v742 = vunpack.c.h.b16 %v706
          %v743 = vunpack.c.l.b16 %v707
          %v744 = vunpack.c.h.b16 %v707
          %v745 = vunpack.c.l.b16 %v708
          %v746 = vunpack.c.h.b16 %v708
          %v747 = vunpack.c.l.b16 %v709
          %v748 = vunpack.c.h.b16 %v709
          %v749 = vunpack.c.l.b16 %v710
          %v750 = vunpack.c.h.b16 %v710
          %v751 = vunpack.c.l.b16 %v711
          %v752 = vunpack.c.h.b16 %v711
          %v753 = vunpack.c.l.b16 %v712
          %v754 = vunpack.c.h.b16 %v712
          %v755 = vunpack.c.l.b16 %v713
          %v756 = vunpack.c.h.b16 %v713
          %v757 = vunpack.c.l.b16 %v714
          %v758 = vunpack.c.h.b16 %v714
          %v759 = vunpack.c.l.b16 %v715
          %v760 = vunpack.c.h.b16 %v715
          %v761 = vunpack.c.l.b16 %v716
          %v762 = vunpack.c.h.b16 %v716
          %v763 = vunpack.c.l.b16 %v717
          %v764 = vunpack.c.h.b16 %v717
          %v765 = vunpack.c.l.b16 %v718
          %v766 = vunpack.c.h.b16 %v718
          %v767 = vpack.c.b16 %v737, %v735
          %v768 = vpack.c.b16 %v738, %v736
          %v769 = vpack.c.b16 %v741, %v739
          %v770 = vpack.c.b16 %v742, %v740
          %v771 = vpack.c.b16 %v745, %v743
          %v772 = vpack.c.b16 %v746, %v744
          %v773 = vpack.c.b16 %v749, %v747
          %v774 = vpack.c.b16 %v750, %v748
          %v775 = vpack.c.b16 %v753, %v751
          %v776 = vpack.c.b16 %v754, %v752
          %v777 = vpack.c.b16 %v757, %v755
          %v778 = vpack.c.b16 %v758, %v756
          %v779 = vpack.c.b16 %v761, %v759
          %v780 = vpack.c.b16 %v762, %v760
          %v781 = vpack.c.b16 %v765, %v763
          %v782 = vpack.c.b16 %v766, %v764
          %799 = vmatprep.subr.bf16.mxu0 %v782
          %800 = vmatpush1.bf16.msra.mxu0 %v781
          %801 = vmatprep.subr.bf16.mxu0 %v780
          %802 = vmatpush1.bf16.msra.mxu0 %v779
          %803 = vmatprep.subr.bf16.mxu0 %v778
          %804 = vmatpush1.bf16.msra.mxu0 %v777
          %805 = vmatprep.subr.bf16.mxu0 %v776
          %806 = vmatpush1.bf16.msra.mxu0 %v775
          %807 = vmatprep.subr.bf16.mxu0 %v774
          %808 = vmatpush1.bf16.msra.mxu0 %v773
          %809 = vmatprep.subr.bf16.mxu0 %v772
          %810 = vmatpush1.bf16.msra.mxu0 %v771
          %811 = vmatprep.subr.bf16.mxu0 %v770
          %812 = vmatpush1.bf16.msra.mxu0 %v769
          %813 = vmatprep.subr.bf16.mxu0 %v768
          %814 = vmatpush1.bf16.msra.mxu0 %v767
          %815 = vmatprep.subr.bf16.mxu0 0
          %816 = vmatpush2.bf16.msra.mxu0 0
          %817 = vmatprep.subr.bf16.mxu0 0
          %818 = vmatpush2.bf16.msra.mxu0 0
          %819 = vmatprep.subr.bf16.mxu0 0
          %820 = vmatpush2.bf16.msra.mxu0 0
          %821 = vmatprep.subr.bf16.mxu0 0
          %822 = vmatpush2.bf16.msra.mxu0 0
          %823 = vmatprep.subr.bf16.mxu0 0
          %824 = vmatpush2.bf16.msra.mxu0 0
          %825 = vmatprep.subr.bf16.mxu0 0
          %826 = vmatpush2.bf16.msra.mxu0 0
          %827 = vmatprep.subr.bf16.mxu0 0
          %828 = vmatpush2.bf16.msra.mxu0 0
          %829 = vmatprep.subr.bf16.mxu0 0
          %830 = vmatpush2.bf16.msra.mxu0 0
          %831 = vmatprep.mubr.bf16.mxu0 0
          %832 = vmatmul.mubr.bf16.gmra.mxu0 %v702
          %v833 = vpop.f32.mrf.mxu0
          %v834 = vadd.f32 0.0, %v833
          %v835 = vpop.f32.mrf.mxu0
          %v836 = vadd.f32 0.0, %v835
          %v837 = vpop.f32.mrf.mxu0
          %v838 = vpop.f32.mrf.mxu0
          %839 = vdwg.mxu0
          %v840 = vadd.f32 %v698, %v834
          %v841 = vadd.f32 %v699, %v836
          %842 = vst [vmem:[#allocation2] sm:$0xff] %v840
          %843 = vst [vmem:[#allocation2 + $0x8] sm:$0xff] %v841
        $region64: #{tpu_custom_call.1} parent=39 // pred_fallthru
          _
        %s844 = sld [smem:[#allocation6 + %s43]]
        %p845 = scmp.gt.s32.totalorder %s844, 3
        // Predicated region
        $region65: #{tpu_custom_call.1} parent=39 // pred_check
          %p846 = pneg %p845
        $region66: #{tpu_custom_call.1} parent=39 // pred_check_branch
          %848 = sbr.rel (%p846) target = $region68
        $region67: #{tpu_custom_call.1} parent=39 // pred_region
          %s849 = sadd.s32 %s380, 3
          %s850 = sld [smem:[#allocation5 + %s849]]
          %v851 = vld [vmem:[#allocation2] sm:$0xff]
          %v852 = vld [vmem:[#allocation2 + $0x8] sm:$0xff]
          %s853 = smul.addr %s850, 4
          %s854 = scalar_lea.vmem %s363, %s853
          %v855 = vld [vmem:[%s854] sm:$0xf]
          %v856 = vld [vmem:[%s306 + $0x180] sm:$0xff]
          %v857 = vld [vmem:[%s306 + $0x188] sm:$0xff]
          %v858 = vld [vmem:[%s306 + $0x190] sm:$0xff]
          %v859 = vld [vmem:[%s306 + $0x198] sm:$0xff]
          %v860 = vld [vmem:[%s306 + $0x1a0] sm:$0xff]
          %v861 = vld [vmem:[%s306 + $0x1a8] sm:$0xff]
          %v862 = vld [vmem:[%s306 + $0x1b0] sm:$0xff]
          %v863 = vld [vmem:[%s306 + $0x1b8] sm:$0xff]
          %v864 = vld [vmem:[%s306 + $0x1c0] sm:$0xff]
          %v865 = vld [vmem:[%s306 + $0x1c8] sm:$0xff]
          %v866 = vld [vmem:[%s306 + $0x1d0] sm:$0xff]
          %v867 = vld [vmem:[%s306 + $0x1d8] sm:$0xff]
          %v868 = vld [vmem:[%s306 + $0x1e0] sm:$0xff]
          %v869 = vld [vmem:[%s306 + $0x1e8] sm:$0xff]
          %v870 = vld [vmem:[%s306 + $0x1f0] sm:$0xff]
          %v871 = vld [vmem:[%s306 + $0x1f8] sm:$0xff]
          %v888 = vunpack.c.l.b16 %v856
          %v889 = vunpack.c.h.b16 %v856
          %v890 = vunpack.c.l.b16 %v857
          %v891 = vunpack.c.h.b16 %v857
          %v892 = vunpack.c.l.b16 %v858
          %v893 = vunpack.c.h.b16 %v858
          %v894 = vunpack.c.l.b16 %v859
          %v895 = vunpack.c.h.b16 %v859
          %v896 = vunpack.c.l.b16 %v860
          %v897 = vunpack.c.h.b16 %v860
          %v898 = vunpack.c.l.b16 %v861
          %v899 = vunpack.c.h.b16 %v861
          %v900 = vunpack.c.l.b16 %v862
          %v901 = vunpack.c.h.b16 %v862
          %v902 = vunpack.c.l.b16 %v863
          %v903 = vunpack.c.h.b16 %v863
          %v904 = vunpack.c.l.b16 %v864
          %v905 = vunpack.c.h.b16 %v864
          %v906 = vunpack.c.l.b16 %v865
          %v907 = vunpack.c.h.b16 %v865
          %v908 = vunpack.c.l.b16 %v866
          %v909 = vunpack.c.h.b16 %v866
          %v910 = vunpack.c.l.b16 %v867
          %v911 = vunpack.c.h.b16 %v867
          %v912 = vunpack.c.l.b16 %v868
          %v913 = vunpack.c.h.b16 %v868
          %v914 = vunpack.c.l.b16 %v869
          %v915 = vunpack.c.h.b16 %v869
          %v916 = vunpack.c.l.b16 %v870
          %v917 = vunpack.c.h.b16 %v870
          %v918 = vunpack.c.l.b16 %v871
          %v919 = vunpack.c.h.b16 %v871
          %v920 = vpack.c.b16 %v890, %v888
          %v921 = vpack.c.b16 %v891, %v889
          %v922 = vpack.c.b16 %v894, %v892
          %v923 = vpack.c.b16 %v895, %v893
          %v924 = vpack.c.b16 %v898, %v896
          %v925 = vpack.c.b16 %v899, %v897
          %v926 = vpack.c.b16 %v902, %v900
          %v927 = vpack.c.b16 %v903, %v901
          %v928 = vpack.c.b16 %v906, %v904
          %v929 = vpack.c.b16 %v907, %v905
          %v930 = vpack.c.b16 %v910, %v908
          %v931 = vpack.c.b16 %v911, %v909
          %v932 = vpack.c.b16 %v914, %v912
          %v933 = vpack.c.b16 %v915, %v913
          %v934 = vpack.c.b16 %v918, %v916
          %v935 = vpack.c.b16 %v919, %v917
          %952 = vmatprep.subr.bf16.mxu0 %v935
          %953 = vmatpush1.bf16.msra.mxu0 %v934
          %954 = vmatprep.subr.bf16.mxu0 %v933
          %955 = vmatpush1.bf16.msra.mxu0 %v932
          %956 = vmatprep.subr.bf16.mxu0 %v931
          %957 = vmatpush1.bf16.msra.mxu0 %v930
          %958 = vmatprep.subr.bf16.mxu0 %v929
          %959 = vmatpush1.bf16.msra.mxu0 %v928
          %960 = vmatprep.subr.bf16.mxu0 %v927
          %961 = vmatpush1.bf16.msra.mxu0 %v926
          %962 = vmatprep.subr.bf16.mxu0 %v925
          %963 = vmatpush1.bf16.msra.mxu0 %v924
          %964 = vmatprep.subr.bf16.mxu0 %v923
          %965 = vmatpush1.bf16.msra.mxu0 %v922
          %966 = vmatprep.subr.bf16.mxu0 %v921
          %967 = vmatpush1.bf16.msra.mxu0 %v920
          %968 = vmatprep.subr.bf16.mxu0 0
          %969 = vmatpush2.bf16.msra.mxu0 0
          %970 = vmatprep.subr.bf16.mxu0 0
          %971 = vmatpush2.bf16.msra.mxu0 0
          %972 = vmatprep.subr.bf16.mxu0 0
          %973 = vmatpush2.bf16.msra.mxu0 0
          %974 = vmatprep.subr.bf16.mxu0 0
          %975 = vmatpush2.bf16.msra.mxu0 0
          %976 = vmatprep.subr.bf16.mxu0 0
          %977 = vmatpush2.bf16.msra.mxu0 0
          %978 = vmatprep.subr.bf16.mxu0 0
          %979 = vmatpush2.bf16.msra.mxu0 0
          %980 = vmatprep.subr.bf16.mxu0 0
          %981 = vmatpush2.bf16.msra.mxu0 0
          %982 = vmatprep.subr.bf16.mxu0 0
          %983 = vmatpush2.bf16.msra.mxu0 0
          %984 = vmatprep.mubr.bf16.mxu0 0
          %985 = vmatmul.mubr.bf16.gmra.mxu0 %v855
          %v986 = vpop.f32.mrf.mxu0
          %v987 = vadd.f32 0.0, %v986
          %v988 = vpop.f32.mrf.mxu0
          %v989 = vadd.f32 0.0, %v988
          %v990 = vpop.f32.mrf.mxu0
          %v991 = vpop.f32.mrf.mxu0
          %992 = vdwg.mxu0
          %v993 = vadd.f32 %v851, %v987
          %v994 = vadd.f32 %v852, %v989
          %995 = vst [vmem:[#allocation2] sm:$0xff] %v993
          %996 = vst [vmem:[#allocation2 + $0x8] sm:$0xff] %v994
        $region68: #{tpu_custom_call.1} parent=39 // pred_fallthru
          _
        %v997 = vld [vmem:[#allocation2] sm:$0xff]
        %v998 = vld [vmem:[#allocation2 + $0x8] sm:$0xff]
        %v999 = vmax.f32 %v997, 0.0
        %v1000 = vmax.f32 %v998, 0.0
        %v1001 = vpack.c.bf16 %v999, %v999
        %v1002 = vpack.c.bf16 %v1000, %v1000
        %v1003 = vld [vmem:[#allocation13] sm:$0xff]
        %v1004 = vld [vmem:[%s324] sm:$0xf]
        %v1005 = vld [vmem:[%s324 + $0x4] sm:$0xf]
        %v1006 = vld [vmem:[%s324 + $0x8] sm:$0xf]
        %v1007 = vld [vmem:[%s324 + $0xc] sm:$0xf]
        %v1008 = vld [vmem:[%s324 + $0x10] sm:$0xf]
        %v1009 = vld [vmem:[%s324 + $0x14] sm:$0xf]
        %v1010 = vld [vmem:[%s324 + $0x18] sm:$0xf]
        %v1011 = vld [vmem:[%s324 + $0x1c] sm:$0xf]
        %v1012 = vld [vmem:[%s324 + $0x20] sm:$0xf]
        %v1013 = vld [vmem:[%s324 + $0x24] sm:$0xf]
        %v1014 = vld [vmem:[%s324 + $0x28] sm:$0xf]
        %v1015 = vld [vmem:[%s324 + $0x2c] sm:$0xf]
        %v1016 = vld [vmem:[%s324 + $0x30] sm:$0xf]
        %v1017 = vld [vmem:[%s324 + $0x34] sm:$0xf]
        %v1018 = vld [vmem:[%s324 + $0x38] sm:$0xf]
        %v1019 = vld [vmem:[%s324 + $0x3c] sm:$0xf]
        %v1020 = vld [vmem:[%s324 + $0x40] sm:$0xf]
        %v1021 = vld [vmem:[%s324 + $0x44] sm:$0xf]
        %v1022 = vld [vmem:[%s324 + $0x48] sm:$0xf]
        %v1023 = vld [vmem:[%s324 + $0x4c] sm:$0xf]
        %v1024 = vld [vmem:[%s324 + $0x50] sm:$0xf]
        %v1025 = vld [vmem:[%s324 + $0x54] sm:$0xf]
        %v1026 = vld [vmem:[%s324 + $0x58] sm:$0xf]
        %v1027 = vld [vmem:[%s324 + $0x5c] sm:$0xf]
        %v1028 = vld [vmem:[%s324 + $0x60] sm:$0xf]
        %v1029 = vld [vmem:[%s324 + $0x64] sm:$0xf]
        %v1030 = vld [vmem:[%s324 + $0x68] sm:$0xf]
        %v1031 = vld [vmem:[%s324 + $0x6c] sm:$0xf]
        %v1032 = vld [vmem:[%s324 + $0x70] sm:$0xf]
        %v1033 = vld [vmem:[%s324 + $0x74] sm:$0xf]
        %v1034 = vld [vmem:[%s324 + $0x78] sm:$0xf]
        %v1035 = vld [vmem:[%s324 + $0x7c] sm:$0xf]
        %v1068 = vunpack.c.l.b16 %v1004
        %v1069 = vunpack.c.l.b16 %v1005
        %v1070 = vunpack.c.l.b16 %v1006
        %v1071 = vunpack.c.l.b16 %v1007
        %v1072 = vunpack.c.l.b16 %v1008
        %v1073 = vunpack.c.l.b16 %v1009
        %v1074 = vunpack.c.l.b16 %v1010
        %v1075 = vunpack.c.l.b16 %v1011
        %v1076 = vunpack.c.l.b16 %v1012
        %v1077 = vunpack.c.l.b16 %v1013
        %v1078 = vunpack.c.l.b16 %v1014
        %v1079 = vunpack.c.l.b16 %v1015
        %v1080 = vunpack.c.l.b16 %v1016
        %v1081 = vunpack.c.l.b16 %v1017
        %v1082 = vunpack.c.l.b16 %v1018
        %v1083 = vunpack.c.l.b16 %v1019
        %v1084 = vunpack.c.l.b16 %v1020
        %v1085 = vunpack.c.l.b16 %v1021
        %v1086 = vunpack.c.l.b16 %v1022
        %v1087 = vunpack.c.l.b16 %v1023
        %v1088 = vunpack.c.l.b16 %v1024
        %v1089 = vunpack.c.l.b16 %v1025
        %v1090 = vunpack.c.l.b16 %v1026
        %v1091 = vunpack.c.l.b16 %v1027
        %v1092 = vunpack.c.l.b16 %v1028
        %v1093 = vunpack.c.l.b16 %v1029
        %v1094 = vunpack.c.l.b16 %v1030
        %v1095 = vunpack.c.l.b16 %v1031
        %v1096 = vunpack.c.l.b16 %v1032
        %v1097 = vunpack.c.l.b16 %v1033
        %v1098 = vunpack.c.l.b16 %v1034
        %v1099 = vunpack.c.l.b16 %v1035
        %v1100 = vpack.c.b16 %v1069, %v1068
        %v1101 = vpack.c.b16 %v1071, %v1070
        %v1102 = vpack.c.b16 %v1073, %v1072
        %v1103 = vpack.c.b16 %v1075, %v1074
        %v1104 = vpack.c.b16 %v1077, %v1076
        %v1105 = vpack.c.b16 %v1079, %v1078
        %v1106 = vpack.c.b16 %v1081, %v1080
        %v1107 = vpack.c.b16 %v1083, %v1082
        %v1108 = vpack.c.b16 %v1085, %v1084
        %v1109 = vpack.c.b16 %v1087, %v1086
        %v1110 = vpack.c.b16 %v1089, %v1088
        %v1111 = vpack.c.b16 %v1091, %v1090
        %v1112 = vpack.c.b16 %v1093, %v1092
        %v1113 = vpack.c.b16 %v1095, %v1094
        %v1114 = vpack.c.b16 %v1097, %v1096
        %v1115 = vpack.c.b16 %v1099, %v1098
        %1132 = vmatprep.subr.bf16.mxu0 0
        %1133 = vmatpush1.bf16.msra.mxu0 %v1107
        %1134 = vmatprep.subr.bf16.mxu0 0
        %1135 = vmatpush1.bf16.msra.mxu0 %v1106
        %1136 = vmatprep.subr.bf16.mxu0 0
        %1137 = vmatpush1.bf16.msra.mxu0 %v1105
        %1138 = vmatprep.subr.bf16.mxu0 0
        %1139 = vmatpush1.bf16.msra.mxu0 %v1104
        %1140 = vmatprep.subr.bf16.mxu0 0
        %1141 = vmatpush1.bf16.msra.mxu0 %v1103
        %1142 = vmatprep.subr.bf16.mxu0 0
        %1143 = vmatpush1.bf16.msra.mxu0 %v1102
        %1144 = vmatprep.subr.bf16.mxu0 0
        %1145 = vmatpush1.bf16.msra.mxu0 %v1101
        %1146 = vmatprep.subr.bf16.mxu0 0
        %1147 = vmatpush1.bf16.msra.mxu0 %v1100
        %1148 = vmatprep.subr.bf16.mxu0 0
        %1149 = vmatpush2.bf16.msra.mxu0 %v1115
        %1150 = vmatprep.subr.bf16.mxu0 0
        %1151 = vmatpush2.bf16.msra.mxu0 %v1114
        %1152 = vmatprep.subr.bf16.mxu0 0
        %1153 = vmatpush2.bf16.msra.mxu0 %v1113
        %1154 = vmatprep.subr.bf16.mxu0 0
        %1155 = vmatpush2.bf16.msra.mxu0 %v1112
        %1156 = vmatprep.subr.bf16.mxu0 0
        %1157 = vmatpush2.bf16.msra.mxu0 %v1111
        %1158 = vmatprep.subr.bf16.mxu0 0
        %1159 = vmatpush2.bf16.msra.mxu0 %v1110
        %1160 = vmatprep.subr.bf16.mxu0 0
        %1161 = vmatpush2.bf16.msra.mxu0 %v1109
        %1162 = vmatprep.subr.bf16.mxu0 0
        %1163 = vmatpush2.bf16.msra.mxu0 %v1108
        %1164 = vmatprep.mubr.bf16.mxu0 %v1002
        %1165 = vmatmul.mubr.bf16.gmra.mxu0 %v1001
        %v1166 = vpop.f32.mrf.mxu0
        %v1167 = vadd.f32 0.0, %v1166
        %v1168 = vpop.f32.mrf.mxu0
        %v1169 = vpop.f32.mrf.mxu0
        %v1170 = vpop.f32.mrf.mxu0
        %1171 = vdwg.mxu0
        %v1172 = vadd.f32 %v1003, %v1167
        %1173 = vst [vmem:[#allocation13] sm:$0xff] %v1172
        // Predicated region
        $region69: #{tpu_custom_call.1} parent=39 // pred_check
          %p1174 = pneg %p199
        $region70: #{tpu_custom_call.1} parent=39 // pred_check_branch
          %1176 = sbr.rel (%p1174) target = $region72
        $region71: #{tpu_custom_call.1} parent=39 // pred_region
          %s1178 = ssub.s32 128, 128
          %1179 = vsyncadd [#allocation9], %s1178
          %s1180 = smul.addr %s42, 128
          %s1181 = scalar_lea.hbm %s8, %s1180
          %s1183 = sshll.u32 [#allocation13], 4
          %s1184 = int_to_ptr.vmem [resolvable:$true] %s1183
          %1186 = dma.vmem_to_hbm [thread:$0]  %s1184, 128, %s1181, [#allocation9]
        $region72: #{tpu_custom_call.1} parent=39 // pred_fallthru
          _
        // Predicated region
        $region73: #{tpu_custom_call.1} parent=39 // pred_check
          %p1187 = pneg %p199
        $region74: #{tpu_custom_call.1} parent=39 // pred_check_branch
          %1189 = sbr.rel (%p1187) target = $region76
        $region75: #{tpu_custom_call.1} parent=39 // pred_region
          %1190 = dma.done [#allocation9], 128
        $region76: #{tpu_custom_call.1} parent=39 // pred_fallthru
          _
      $region40: #{tpu_custom_call.1} parent=5 // pred_fallthru
        _
      %p1191 = scmp.le.s32.totalorder 2, %s33
      // Predicated region
      $region77: #{tpu_custom_call.1} parent=5 // pred_check
        %p1192 = pneg %p1191
      $region78: #{tpu_custom_call.1} parent=5 // pred_check_branch
        %1194 = sbr.rel (%p1192) target = $region80
      $region79: #{tpu_custom_call.1} parent=5 // pred_region
        %s1195 = ssub.s32 %s33, 2
      $region80: #{tpu_custom_call.1} parent=5 // pred_fallthru
        _
    $region6: #{tpu_custom_call.1} parent=1 // loop_footer
      %s37 = sadd.s32 1, %s33
    $region7: #{tpu_custom_call.1} parent=1 // loop_footer_branch
      %32 = sbr.rel target = $region3
    $region8: #{tpu_custom_call.1} parent=1 // loop_exit
      _
    %1196 = vsyncpa [#allocation8], 1
    %s1197 = scalar_lea.sflag [#allocation8], 1
    %1198 = vsyncpa %s1197, 1
    %1199 = vsyncpa [#allocation11], 1
    %s1200 = scalar_lea.sflag [#allocation11], 1
    %1201 = vsyncpa %s1200, 1
    %1202 = vsyncpa [#allocation9], 1
    %s1203 = scalar_lea.sflag [#allocation9], 1
    %1204 = vsyncpa %s1203, 1

</llo_original>
